<compile_context>
chip_gen: v5e
topology: v5e:2x2
jax: 0.10.0
libtpu: 0.0.40
codegen_flags: <defaults>
</compile_context>

<pallas_src>
import functools

import jax
import jax.numpy as jnp
from jax.experimental import pallas as pl
from jax.experimental.pallas import tpu as pltpu


def _round_up(x, m):
    return (x + m - 1) // m * m


def _embeddings_kernel(patch_ref, w_ref, add_ref, out_ref):
    """One grid step: (TM token rows) x (full padded hidden) for one batch elem.

    patch_ref : (TM, K_pad)    bf16  row 0 of token-tile 0 is a zero dummy row
                                     (cls slot); K pad cols are zero.
    w_ref     : (K_pad, H_pad) bf16  resident across the whole grid.
    add_ref   : (TM, H_pad)    bf16  cls row: cls_token + pos[0]
                                     patch rows: conv_bias + pos[1+p]
                                     pad rows/cols: 0.  Resident across batch.
    out_ref   : (TM, H_pad)    bf16
    """
    acc = jnp.dot(patch_ref[...], w_ref[...], preferred_element_type=jnp.float32)
    out_ref[...] = (acc + add_ref[...].astype(jnp.float32)).astype(out_ref.dtype)
    # TODO(synk): nn.Dropout is identity in eval mode; training-mode dropout
    # (pltpu.prng_seed / prng_random_bits mask) is not implemented here.


@functools.partial(jax.jit, static_argnames=("patch_size", "out_dtype"))
def embeddings_forward(x, conv_w, conv_b, cls_token, pos_emb, patch_size,
                       out_dtype=jnp.bfloat16):
    """x: (B, C, H, W) float32, NCHW (PyTorch convention)."""
    B, C, H, W = x.shape
    ph, pw = patch_size
    hidden = conv_w.shape[0]
    n_h, n_w = H // ph, W // pw
    n_patches = n_h * n_w
    K = C * ph * pw
    n_tok = n_patches + 1

    # ---- aligned/padded sizes (lane = 128, bf16 sublane pack = 16) ---------
    H_pad = _round_up(hidden, 128)
    K_pad = _round_up(K, 128)
    TM = 256 if n_tok >= 256 else _round_up(n_tok, 16)
    n_tok_pad = _round_up(n_tok, TM)
    tiles_per_batch = n_tok_pad // TM
    # v7x megacore: make sure there are >= 2 parallel grid steps.
    if B * tiles_per_batch < 2 and n_tok > 16:
        TM = _round_up((n_tok + 1) // 2, 16)
        n_tok_pad = _round_up(n_tok, TM)
        tiles_per_batch = n_tok_pad // TM

    # ---- glue (fused into one XLA pre-pass under jit) ----------------------
    patches = x.reshape(B, C, n_h, ph, n_w, pw)
    patches = patches.transpose(0, 2, 4, 1, 3, 5).reshape(B, n_patches, K)
    patches = patches.astype(jnp.bfloat16)            # bf16 operands for MXU
    # Prepend one zero dummy row per batch (-> cls slot), pad token & K axes.
    patches = jnp.pad(
        patches, ((0, 0), (1, n_tok_pad - n_tok), (0, K_pad - K)))

    # Conv weight OIHW -> (K, hidden), zero-pad K rows / hidden cols, bf16.
    w_mat = conv_w.reshape(hidden, K).T.astype(jnp.bfloat16)
    w_mat = jnp.pad(w_mat, ((0, K_pad - K), (0, H_pad - hidden)))

    # Fold cls / conv bias / position embedding into one bf16 additive table.
    cls2d = cls_token.reshape(1, hidden)
    pos2d = pos_emb.reshape(n_tok, hidden)
    addend = pos2d + jnp.concatenate(
        [cls2d,
         jnp.broadcast_to(conv_b.reshape(1, hidden), (n_patches, hidden))],
        axis=0)
    addend = jnp.pad(addend.astype(jnp.bfloat16),
                     ((0, n_tok_pad - n_tok), (0, H_pad - hidden)))

    # Token tiles OUTER, batch INNER: addend block index is constant across
    # the inner batch loop (stays resident); the weight index is constant
    # across the whole grid.
    grid = (tiles_per_batch, B)
    # TODO(synk): for very large hidden sizes add an H_pad grid axis (TN tile)
    # and re-budget VMEM (v7x has only 32 MiB scoped / 64 MiB physical);
    # current ViT-class sizes fit the default scoped limits on v5e/v6e/v7x.
    out = pl.pallas_call(
        _embeddings_kernel,
        out_shape=jax.ShapeDtypeStruct((B, n_tok_pad, H_pad), out_dtype),
        grid_spec=pltpu.PrefetchScalarGridSpec(
            num_scalar_prefetch=0,
            grid=grid,
            in_specs=[
                pl.BlockSpec((None, TM, K_pad), lambda t, b: (b, t, 0)),
                pl.BlockSpec((K_pad, H_pad), lambda t, b: (0, 0)),   # resident
                pl.BlockSpec((TM, H_pad), lambda t, b: (t, 0)),      # resident / batch
            ],
            out_specs=pl.BlockSpec((None, TM, H_pad), lambda t, b: (b, t, 0)),
        ),
        compiler_params=pltpu.CompilerParams(
            dimension_semantics=("parallel", "parallel")),
    )(patches, w_mat, addend)

    # Strip alignment padding (no-op slices at real ViT sizes).
    return out[:, :n_tok, :hidden]


def reference_forward_f32(x, conv_w, conv_b, cls_token, pos_emb, patch_size):
    """Pure-JAX f32 reference reproducing the PyTorch forward (eval mode)."""
    B = x.shape[0]
    hidden = conv_w.shape[0]
    y = jax.lax.conv_general_dilated(
        x, conv_w, window_strides=patch_size, padding="VALID",
        dimension_numbers=("NCHW", "OIHW", "NCHW"))
    y = y + conv_b.reshape(1, hidden, 1, 1)
    y = y.reshape(B, hidden, -1)            # flatten(2)
    y = jnp.transpose(y, (0, 2, 1))         # transpose(-1, -2)
    cls = jnp.broadcast_to(cls_token, (B, 1, hidden))
    y = jnp.concatenate([cls, y], axis=1)
    return y + pos_emb                      # dropout == identity (eval)


def reference_forward_matched(x, conv_w, conv_b, cls_token, pos_emb, patch_size,
                              out_dtype=jnp.bfloat16):
    """Reference using the same bf16-operand / bf16-addend / bf16-store math."""
    B, C, H, W = x.shape
    ph, pw = patch_size
    hidden = conv_w.shape[0]
    n_h, n_w = H // ph, W // pw
    n_patches = n_h * n_w
    K = C * ph * pw
    patches = x.reshape(B, C, n_h, ph, n_w, pw).transpose(0, 2, 4, 1, 3, 5)
    patches = patches.reshape(B, n_patches, K).astype(jnp.bfloat16)
    w = conv_w.reshape(hidden, K).T.astype(jnp.bfloat16)
    proj = jnp.einsum("bpk,kh->bph", patches, w,
                      preferred_element_type=jnp.float32)
    addend = pos_emb.reshape(n_patches + 1, hidden) + jnp.concatenate(
        [cls_token.reshape(1, hidden),
         jnp.broadcast_to(conv_b.reshape(1, hidden), (n_patches, hidden))],
        axis=0)
    addend = addend.astype(jnp.bfloat16).astype(jnp.float32)
    proj_full = jnp.concatenate(
        [jnp.zeros((B, 1, hidden), jnp.float32), proj], axis=1)
    return (proj_full + addend[None]).astype(out_dtype)


if __name__ == "__main__":
    # Small, module-consistent shapes.
    img_size = 16
    patch = 4
    hidden_size = 32
    in_channels = 3
    batch = 2
    patch_size = (patch, patch)
    n_patches = (img_size // patch) ** 2

    key = jax.random.PRNGKey(0)
    kx, kw, kb, kc, kp = jax.random.split(key, 5)
    x = jax.random.normal(kx, (batch, in_channels, img_size, img_size),
                          dtype=jnp.float32)
    conv_w = jax.random.normal(
        kw, (hidden_size, in_channels, patch, patch), dtype=jnp.float32) * 0.05
    conv_b = jax.random.normal(kb, (hidden_size,), dtype=jnp.float32) * 0.05
    # (PyTorch init is zeros for these; use deterministic non-zero values so
    #  the cls/pos add paths are actually exercised.)
    cls_token = jax.random.normal(kc, (1, 1, hidden_size), dtype=jnp.float32) * 0.05
    pos_emb = jax.random.normal(
        kp, (1, n_patches + 1, hidden_size), dtype=jnp.float32) * 0.05

    out = embeddings_forward(x, conv_w, conv_b, cls_token, pos_emb, patch_size)
    out = jax.block_until_ready(out)
    assert out.shape == (batch, n_patches + 1, hidden_size)
    assert out.dtype == jnp.bfloat16

    # Tight check vs. a reference using identical bf16 operand/addend/store math.
    ref_matched = reference_forward_matched(
        x, conv_w, conv_b, cls_token, pos_emb, patch_size)
    assert jnp.allclose(out.astype(jnp.float32),
                        ref_matched.astype(jnp.float32),
                        atol=1e-2, rtol=1e-2), \
        "mismatch vs bf16-matched reference"

    # Loose check vs. the exact f32 PyTorch-equivalent forward (bf16 operands,
    # bf16 addend and bf16 store each introduce ~0.4% relative rounding).
    ref_f32 = reference_forward_f32(x, conv_w, conv_b, cls_token, pos_emb,
                                    patch_size)
    assert jnp.allclose(out.astype(jnp.float32), ref_f32,
                        atol=4e-2, rtol=4e-2), \
        "mismatch vs f32 reference"

    print("KERNEL_OK")
</pallas_src>

<mosaic_0001>
module attributes {stable_mosaic.version = 11 : i64} {
  func.func @_embeddings_kernel(%arg0: i32, %arg1: i32, %arg2: memref<1x32x128xbf16, #tpu.memory_space<vmem>>, %arg3: memref<128x128xbf16, #tpu.memory_space<vmem>>, %arg4: memref<32x128xbf16, #tpu.memory_space<vmem>>, %arg5: memref<1x32x128xbf16, #tpu.memory_space<vmem>>) attributes {dimension_semantics = [#tpu.dimension_semantics<parallel>, #tpu.dimension_semantics<parallel>], iteration_bounds = array<i64: 1, 2>, scalar_prefetch = 0 : i64, scratch_operands = 0 : i64, tpu.core_type = #tpu.core_type<tc>, window_params = [{transform_indices = @transform_0, window_bounds = array<i64: 1, 32, 128>}, {pipeline_mode = #tpu.pipeline_mode<synchronous>, transform_indices = @transform_1, window_bounds = array<i64: 128, 128>}, {transform_indices = @transform_2, window_bounds = array<i64: 32, 128>}, {transform_indices = @transform_3, window_bounds = array<i64: 1, 32, 128>}]} {
    %c0 = arith.constant 0 : index
    %c0_0 = arith.constant 0 : index
    %c0_1 = arith.constant 0 : index
    %0 = vector.load %arg2[%c0, %c0_0, %c0_1] : memref<1x32x128xbf16, #tpu.memory_space<vmem>>, vector<1x32x128xbf16>
    %1 = vector.shape_cast %0 : vector<1x32x128xbf16> to vector<32x128xbf16>
    %c0_2 = arith.constant 0 : index
    %c0_3 = arith.constant 0 : index
    %2 = vector.load %arg3[%c0_2, %c0_3] : memref<128x128xbf16, #tpu.memory_space<vmem>>, vector<128x128xbf16>
    %cst = arith.constant dense<0.000000e+00> : vector<32x128xf32>
    %3 = tpu.matmul %1, %2, %cst {dimension_numbers = #tpu.dot_dimension_numbers<[1], [0], [0], [1], [0, 0, 1, 1], [], []>} : vector<32x128xbf16>, vector<128x128xbf16>, vector<32x128xf32> -> vector<32x128xf32>
    %c0_4 = arith.constant 0 : index
    %c0_5 = arith.constant 0 : index
    %4 = vector.load %arg4[%c0_4, %c0_5] : memref<32x128xbf16, #tpu.memory_space<vmem>>, vector<32x128xbf16>
    %5 = arith.extf %4 : vector<32x128xbf16> to vector<32x128xf32>
    %6 = arith.addf %3, %5 : vector<32x128xf32>
    %7 = arith.truncf %6 : vector<32x128xf32> to vector<32x128xbf16>
    %c0_6 = arith.constant 0 : index
    %c0_7 = arith.constant 0 : index
    %c0_8 = arith.constant 0 : index
    %8 = vector.load %arg5[%c0_6, %c0_7, %c0_8] : memref<1x32x128xbf16, #tpu.memory_space<vmem>>, vector<1x32x128xbf16>
    %9 = vector.shape_cast %8 : vector<1x32x128xbf16> to vector<32x128xbf16>
    %10 = vector.shape_cast %7 : vector<32x128xbf16> to vector<1x32x128xbf16>
    tpu.vector_store %arg5[%c0_6, %c0_7, %c0_8], %10 {strides = array<i32>} : memref<1x32x128xbf16, #tpu.memory_space<vmem>>, vector<1x32x128xbf16>,
    return
  }
  func.func @transform_0(%arg0: i32, %arg1: i32) -> (i32, i32, i32) {
    %c0_i32 = arith.constant 0 : i32
    %c0_i32_0 = arith.constant 0 : i32
    return %arg1, %arg0, %c0_i32 : i32, i32, i32
  }
  func.func @transform_1(%arg0: i32, %arg1: i32) -> (i32, i32) {
    %c0_i32 = arith.constant 0 : i32
    %c0_i32_0 = arith.constant 0 : i32
    %c0_i32_1 = arith.constant 0 : i32
    return %c0_i32, %c0_i32_0 : i32, i32
  }
  func.func @transform_2(%arg0: i32, %arg1: i32) -> (i32, i32) {
    %c0_i32 = arith.constant 0 : i32
    %c0_i32_0 = arith.constant 0 : i32
    return %arg0, %c0_i32 : i32, i32
  }
  func.func @transform_3(%arg0: i32, %arg1: i32) -> (i32, i32, i32) {
    %c0_i32 = arith.constant 0 : i32
    %c0_i32_0 = arith.constant 0 : i32
    return %arg1, %arg0, %c0_i32 : i32, i32, i32
  }
}

</mosaic_0001>

<llo_original>
// kernel: embeddings_forward.1
$region0: #{embeddings_forward.1}
  #allocation0 [shape = 'u32[]', space=smem, size = 0x4, offset = 0x4, fixed_abs, tag = 'smem constant byte address 0x4 - core index']
  #allocation1 [shape = 'u32[72,128]{1,0:T(1,128)}', space=vmem, size = 0x9000, scoped, tag = 'internal scratch']
  %s0 = inlined_call_operand.vmem [shape: bf16[2,32,128], index: 0, kind: input, shape index: {}]
  %s1 = inlined_call_operand.vmem [shape: bf16[128,128], index: 1, kind: input, shape index: {}]
  %s2 = inlined_call_operand.vmem [shape: bf16[32,128], index: 2, kind: input, shape index: {}]
  %s3 = inlined_call_operand.vmem [shape: bf16[2,32,128], index: 3, kind: output, shape index: {}]
  %s4 = sld [smem:[#allocation0]]
  $region45: #{embeddings_forward.1} parent=0
    _
  %s6 = ssub.s32 1, %s4
  %s7 = scalar_select 0, %s6, %s4
  loop: start=0, step=1, limit=4
  $region2: #{embeddings_forward.1} parent=0 // loop_pre_header
    _
  $region3: #{embeddings_forward.1} parent=0 // loop_header
    %s9 = sphi 0, %s13
    %p10 = scmp.ge.s32.totalorder %s9, 4
    %s16 = sphi 0, %s28
    %s17 = sphi 0, %s24
    %s18 = sphi 0, %s16
    %s19 = sphi 0, %s17
    %s20 = sphi 0, %s18
    %s21 = sphi 0, %s19
    %s33 = sphi 0, %s35
    %s36 = sphi 0, %s33
    %s37 = sphi 0, %s36
    %s53 = sphi 0, %s37
    %s57 = sphi 0, %s57
    %s59 = sphi 0, %s57
    %s60 = sphi 0, %s59
    %s74 = sphi 0, %s60
    %s80 = sphi 0, %s82
    %s83 = sphi 0, %s80
    %s84 = sphi 0, %s83
    %s100 = sphi 0, %s84
    %s108 = sphi 0, %s110
    %s111 = sphi 0, %s108
    %s112 = sphi 0, %s111
    %s128 = sphi 0, %s112
  $region4: #{embeddings_forward.1} parent=0 // loop_header_branch
    %12 = sbr.rel (%p10) target = $region8
  $region5: #{embeddings_forward.1} parent=0 // loop_body
    %s14 = ssub.s32 %s9, 1
    %s15 = ssub.s32 %s9, 2
    %s22 = sadd.s32 1, %s17
    %p23 = scmp.ge.s32.totalorder %s22, 2
    %s24 = scalar_select %p23, 0, %s22
    %s25 = sadd.s32 1, %s16
    %s26 = scalar_select %p23, %s25, %s16
    %p27 = scmp.ge.s32.totalorder %s26, 1
    %s28 = scalar_select %p27, 0, %s26
    %s29 = ssub.s32 %s17, %s24
    %s30 = ssub.s32 %s16, %s28
    %s31 = sor.u32 %s29, %s30
    %p32 = scmp.eq.s32.totalorder %s31, 0
    %s34 = sadd.s32 %s33, 1
    %s35 = scalar_select %p32, %s33, %s34
    %p38 = pneg %p32
    %p39 = scmp.eq.s32.totalorder %s9, 1
    %p40 = por %p38, %p39
    %p41 = scmp.ne.s32.totalorder %s33, %s36
    %p42 = scmp.eq.s32.totalorder %s9, 0
    %p43 = por %p41, %p42
    %p44 = scmp.ne.s32.totalorder %s33, %s36
    %p45 = scmp.eq.s32.totalorder %s14, 1
    %p46 = por %p44, %p45
    %p47 = scmp.ne.s32.totalorder %s36, %s37
    %p48 = scmp.eq.s32.totalorder %s14, 0
    %p49 = por %p47, %p48
    %p50 = scmp.ne.s32.totalorder %s36, %s37
    %p51 = scmp.eq.s32.totalorder %s15, 1
    %p52 = por %p50, %p51
    %p54 = scmp.ne.s32.totalorder %s37, %s53
    %p55 = scmp.eq.s32.totalorder %s15, 0
    %p56 = por %p54, %p55
    %s58 = sadd.s32 %s57, 1
    %p61 = scmp.eq.s32.totalorder %s9, 1
    %p62 = scmp.ne.s32.totalorder %s57, %s59
    %p63 = scmp.eq.s32.totalorder %s9, 0
    %p64 = por %p62, %p63
    %p65 = scmp.ne.s32.totalorder %s57, %s59
    %p66 = scmp.eq.s32.totalorder %s14, 1
    %p67 = por %p65, %p66
    %p68 = scmp.ne.s32.totalorder %s59, %s60
    %p69 = scmp.eq.s32.totalorder %s14, 0
    %p70 = por %p68, %p69
    %p71 = scmp.ne.s32.totalorder %s59, %s60
    %p72 = scmp.eq.s32.totalorder %s15, 1
    %p73 = por %p71, %p72
    %p75 = scmp.ne.s32.totalorder %s60, %s74
    %p76 = scmp.eq.s32.totalorder %s15, 0
    %p77 = por %p75, %p76
    %s78 = ssub.s32 %s16, %s28
    %p79 = scmp.eq.s32.totalorder %s78, 0
    %s81 = sadd.s32 %s80, 1
    %s82 = scalar_select %p79, %s80, %s81
    %p85 = pneg %p79
    %p86 = scmp.eq.s32.totalorder %s9, 1
    %p87 = por %p85, %p86
    %p88 = scmp.ne.s32.totalorder %s80, %s83
    %p89 = scmp.eq.s32.totalorder %s9, 0
    %p90 = por %p88, %p89
    %p91 = scmp.ne.s32.totalorder %s80, %s83
    %p92 = scmp.eq.s32.totalorder %s14, 1
    %p93 = por %p91, %p92
    %p94 = scmp.ne.s32.totalorder %s83, %s84
    %p95 = scmp.eq.s32.totalorder %s14, 0
    %p96 = por %p94, %p95
    %p97 = scmp.ne.s32.totalorder %s83, %s84
    %p98 = scmp.eq.s32.totalorder %s15, 1
    %p99 = por %p97, %p98
    %p101 = scmp.ne.s32.totalorder %s84, %s100
    %p102 = scmp.eq.s32.totalorder %s15, 0
    %p103 = por %p101, %p102
    %s104 = ssub.s32 %s17, %s24
    %s105 = ssub.s32 %s16, %s28
    %s106 = sor.u32 %s104, %s105
    %p107 = scmp.eq.s32.totalorder %s106, 0
    %s109 = sadd.s32 %s108, 1
    %s110 = scalar_select %p107, %s108, %s109
    %p113 = pneg %p107
    %p114 = scmp.eq.s32.totalorder %s9, 1
    %p115 = por %p113, %p114
    %p116 = scmp.ne.s32.totalorder %s108, %s111
    %p117 = scmp.eq.s32.totalorder %s9, 0
    %p118 = por %p116, %p117
    %p119 = scmp.ne.s32.totalorder %s108, %s111
    %p120 = scmp.eq.s32.totalorder %s14, 1
    %p121 = por %p119, %p120
    %p122 = scmp.ne.s32.totalorder %s111, %s112
    %p123 = scmp.eq.s32.totalorder %s14, 0
    %p124 = por %p122, %p123
    %p125 = scmp.ne.s32.totalorder %s111, %s112
    %p126 = scmp.eq.s32.totalorder %s15, 1
    %p127 = por %p125, %p126
    %p129 = scmp.ne.s32.totalorder %s112, %s128
    %p130 = scmp.eq.s32.totalorder %s15, 0
    %p131 = por %p129, %p130
    %p132 = scmp.le.s32.totalorder 1, %s9
    %p133 = scmp.lt.s32.totalorder %s9, 3
    %p134 = pnand %p132, %p133
    %p135 = pneg %p134
    // Predicated region
    $region9: #{embeddings_forward.1} parent=5 // pred_check
      _
    $region10: #{embeddings_forward.1} parent=5 // pred_check_branch
      %137 = sbr.rel (%p134) target = $region12
    $region11: #{embeddings_forward.1} parent=5 // pred_region
      %s138 = ssub.s32 %s9, 1
      // Predicated region
      $region13: #{embeddings_forward.1} parent=11 // pred_check
        %p139 = pneg %p70
      $region14: #{embeddings_forward.1} parent=11 // pred_check_branch
        %141 = sbr.rel (%p139) target = $region16
      $region15: #{embeddings_forward.1} parent=11 // pred_region
        _
      $region16: #{embeddings_forward.1} parent=11 // pred_fallthru
        _
      // Predicated region
      $region17: #{embeddings_forward.1} parent=11 // pred_check
        %p142 = pneg %p96
      $region18: #{embeddings_forward.1} parent=11 // pred_check_branch
        %144 = sbr.rel (%p142) target = $region20
      $region19: #{embeddings_forward.1} parent=11 // pred_region
        %s145 = smul.u32 4, %s18
        %p146 = scmp.lt.s32.totalorder %s145, 3
        %s147 = scalar_select %p146, %s145, 3
        %s148 = smul.addr %s147, 4
        %s149 = scalar_lea.vmem %s2, %s148
        %s150 = smul.u32 4, %s18
      $region20: #{embeddings_forward.1} parent=11 // pred_fallthru
        _
    $region12: #{embeddings_forward.1} parent=5 // pred_fallthru
      _
    %p151 = scmp.lt.s32.totalorder %s9, 2
    // Predicated region
    $region21: #{embeddings_forward.1} parent=5 // pred_check
      %p152 = pneg %p151
    $region22: #{embeddings_forward.1} parent=5 // pred_check_branch
      %154 = sbr.rel (%p152) target = $region24
    $region23: #{embeddings_forward.1} parent=5 // pred_region
      // Predicated region
      $region25: #{embeddings_forward.1} parent=23 // pred_check
        %p155 = pneg %p43
      $region26: #{embeddings_forward.1} parent=23 // pred_check_branch
        %157 = sbr.rel (%p155) target = $region28
      $region27: #{embeddings_forward.1} parent=23 // pred_region
        %s158 = smul.u32 4, %s16
        %p159 = scmp.lt.s32.totalorder %s17, 1
        %s160 = scalar_select %p159, %s17, 1
        %p161 = scmp.lt.s32.totalorder %s158, 3
        %s162 = scalar_select %p161, %s158, 3
        %s163 = smul.addr %s160, 4
        %s164 = sadd.s32 %s162, %s163
        %s165 = smul.addr %s164, 4
        %s166 = scalar_lea.vmem %s0, %s165
        %s167 = smul.u32 4, %s16
      $region28: #{embeddings_forward.1} parent=23 // pred_fallthru
        _
    $region24: #{embeddings_forward.1} parent=5 // pred_fallthru
      _
    %p168 = scmp.le.s32.totalorder 1, %s9
    %p169 = scmp.lt.s32.totalorder %s9, 3
    %p170 = pnand %p168, %p169
    %p171 = pneg %p170
    // Predicated region
    $region29: #{embeddings_forward.1} parent=5 // pred_check
      _
    $region30: #{embeddings_forward.1} parent=5 // pred_check_branch
      %173 = sbr.rel (%p170) target = $region32
    $region31: #{embeddings_forward.1} parent=5 // pred_region
      %s174 = ssub.s32 %s9, 1
      %s175 = smul.u32 4, %s18
      %p176 = scmp.lt.s32.totalorder %s19, 1
      %s177 = scalar_select %p176, %s19, 1
      %p178 = scmp.lt.s32.totalorder %s175, 3
      %s179 = scalar_select %p178, %s175, 3
      %s180 = smul.addr %s177, 4
      %s181 = sadd.s32 %s179, %s180
      %s182 = smul.addr %s181, 4
      %s183 = scalar_lea.vmem %s0, %s182
      %p184 = pneg %p49
      %p185 = pneg %p46
      %p186 = pneg %p70
      %p187 = pneg %p67
      %s188 = smul.u32 4, %s18
      %p189 = scmp.lt.s32.totalorder %s188, 3
      %s190 = scalar_select %p189, %s188, 3
      %s191 = smul.addr %s190, 4
      %s192 = scalar_lea.vmem %s2, %s191
      %p193 = pneg %p96
      %p194 = pneg %p93
      %p195 = pneg %p124
      %p196 = pneg %p121
      %s197 = smul.u32 4, %s18
      %p198 = scmp.lt.s32.totalorder %s19, 1
      %s199 = scalar_select %p198, %s19, 1
      %p200 = scmp.lt.s32.totalorder %s197, 3
      %s201 = scalar_select %p200, %s197, 3
      %s202 = smul.addr %s199, 4
      %s203 = sadd.s32 %s201, %s202
      %s204 = smul.addr %s203, 4
      %s205 = scalar_lea.vmem %s3, %s204
      %s206 = smul.u32 4, %s18
      %p207 = scmp.lt.s32.totalorder %s19, 1
      %s208 = scalar_select %p207, %s19, 1
      %p209 = scmp.lt.s32.totalorder %s206, 3
      %s210 = scalar_select %p209, %s206, 3
      %s211 = smul.addr %s208, 4
      %s212 = sadd.s32 %s210, %s211
      %s213 = smul.addr %s212, 4
      %s214 = scalar_lea.vmem %s0, %s213
      %s215 = smul.u32 4, %s18
      %s216 = smul.u32 4, %s18
      %p217 = scmp.lt.s32.totalorder %s216, 3
      %s218 = scalar_select %p217, %s216, 3
      %s219 = smul.addr %s218, 4
      %s220 = scalar_lea.vmem %s2, %s219
      %s221 = smul.u32 4, %s18
      %s222 = smul.u32 4, %s18
      %p223 = scmp.lt.s32.totalorder %s19, 1
      %s224 = scalar_select %p223, %s19, 1
      %p225 = scmp.lt.s32.totalorder %s222, 3
      %s226 = scalar_select %p225, %s222, 3
      %s227 = smul.addr %s224, 4
      %s228 = sadd.s32 %s226, %s227
      %s229 = smul.addr %s228, 4
      %s230 = scalar_lea.vmem %s3, %s229
      %s231 = smul.u32 4, %s18
      %v232 = vld [vmem:[%s214] sm:$0xf]
      %v233 = vld [vmem:[%s214 + $0x4] sm:$0xf]
      %v234 = vld [vmem:[%s214 + $0x8] sm:$0xf]
      %v235 = vld [vmem:[%s214 + $0xc] sm:$0xf]
      %v236 = vld [vmem:[%s1] sm:$0xf]
      %v237 = vld [vmem:[%s1 + $0x4] sm:$0xf]
      %v238 = vld [vmem:[%s1 + $0x8] sm:$0xf]
      %v239 = vld [vmem:[%s1 + $0xc] sm:$0xf]
      %v240 = vld [vmem:[%s1 + $0x10] sm:$0xf]
      %v241 = vld [vmem:[%s1 + $0x14] sm:$0xf]
      %v242 = vld [vmem:[%s1 + $0x18] sm:$0xf]
      %v243 = vld [vmem:[%s1 + $0x1c] sm:$0xf]
      %v244 = vld [vmem:[%s1 + $0x20] sm:$0xf]
      %v245 = vld [vmem:[%s1 + $0x24] sm:$0xf]
      %v246 = vld [vmem:[%s1 + $0x28] sm:$0xf]
      %v247 = vld [vmem:[%s1 + $0x2c] sm:$0xf]
      %v248 = vld [vmem:[%s1 + $0x30] sm:$0xf]
      %v249 = vld [vmem:[%s1 + $0x34] sm:$0xf]
      %v250 = vld [vmem:[%s1 + $0x38] sm:$0xf]
      %v251 = vld [vmem:[%s1 + $0x3c] sm:$0xf]
      %v252 = vld [vmem:[%s220] sm:$0xf]
      %v253 = vld [vmem:[%s220 + $0x4] sm:$0xf]
      %v254 = vld [vmem:[%s220 + $0x8] sm:$0xf]
      %v255 = vld [vmem:[%s220 + $0xc] sm:$0xf]
      %v256 = vunpack.c.l.bf16 %v252
      %v257 = vunpack.c.l.bf16 %v253
      %v258 = vunpack.c.l.bf16 %v254
      %v259 = vunpack.c.l.bf16 %v255
      %v264 = vunpack.c.l.b16 %v232
      %v265 = vunpack.c.l.b16 %v233
      %v266 = vunpack.c.l.b16 %v234
      %v267 = vunpack.c.l.b16 %v235
      %v268 = vpack.c.b16 %v265, %v264
      %v269 = vpack.c.b16 %v267, %v266
      %v288 = vunpack.c.l.b16 %v236
      %v289 = vunpack.c.l.b16 %v237
      %v290 = vunpack.c.l.b16 %v238
      %v291 = vunpack.c.l.b16 %v239
      %v292 = vunpack.c.l.b16 %v240
      %v293 = vunpack.c.l.b16 %v241
      %v294 = vunpack.c.l.b16 %v242
      %v295 = vunpack.c.l.b16 %v243
      %v296 = vunpack.c.l.b16 %v244
      %v297 = vunpack.c.l.b16 %v245
      %v298 = vunpack.c.l.b16 %v246
      %v299 = vunpack.c.l.b16 %v247
      %v300 = vunpack.c.l.b16 %v248
      %v301 = vunpack.c.l.b16 %v249
      %v302 = vunpack.c.l.b16 %v250
      %v303 = vunpack.c.l.b16 %v251
      %v304 = vpack.c.b16 %v289, %v288
      %v305 = vpack.c.b16 %v291, %v290
      %v306 = vpack.c.b16 %v293, %v292
      %v307 = vpack.c.b16 %v295, %v294
      %v308 = vpack.c.b16 %v297, %v296
      %v309 = vpack.c.b16 %v299, %v298
      %v310 = vpack.c.b16 %v301, %v300
      %v311 = vpack.c.b16 %v303, %v302
      %320 = vmatpush.bf16.msra.mxu0 %v311
      %321 = vmatpush.bf16.msra.mxu0 %v310
      %322 = vmatpush.bf16.msra.mxu0 %v309
      %323 = vmatpush.bf16.msra.mxu0 %v308
      %324 = vmatpush.bf16.msra.mxu0 %v307
      %325 = vmatpush.bf16.msra.mxu0 %v306
      %326 = vmatpush.bf16.msra.mxu0 %v305
      %327 = vmatpush.bf16.msra.mxu0 %v304
      %328 = vmatmul.bf16.gmra.mxu0 %v268
      %v329 = vpop.f32.mrf.mxu0
      %v330 = vadd.f32 %v256, %v329
      %v331 = vpop.f32.mrf.mxu0
      %v332 = vadd.f32 %v257, %v331
      %333 = vmatmul.bf16.gmra.mxu0 %v269
      %v334 = vpop.f32.mrf.mxu0
      %v335 = vadd.f32 %v258, %v334
      %v336 = vpop.f32.mrf.mxu0
      %v337 = vadd.f32 %v259, %v336
      %338 = vdwg.mxu0
      %v339 = vpack.c.bf16 %v330, %v330
      %v340 = vpack.c.bf16 %v332, %v332
      %v341 = vpack.c.bf16 %v335, %v335
      %v342 = vpack.c.bf16 %v337, %v337
      %343 = vst [vmem:[%s230] sm:$0xf] %v339
      %344 = vst [vmem:[%s230 + $0x4] sm:$0xf] %v340
      %345 = vst [vmem:[%s230 + $0x8] sm:$0xf] %v341
      %346 = vst [vmem:[%s230 + $0xc] sm:$0xf] %v342
      %s347 = smul.u32 4, %s18
      %p348 = scmp.lt.s32.totalorder %s19, 1
      %s349 = scalar_select %p348, %s19, 1
      %p350 = scmp.lt.s32.totalorder %s347, 3
      %s351 = scalar_select %p350, %s347, 3
      %s352 = smul.addr %s349, 4
      %s353 = sadd.s32 %s351, %s352
      %s354 = smul.addr %s353, 4
      %s355 = scalar_lea.vmem %s3, %s354
      // Predicated region
      $region33: #{embeddings_forward.1} parent=31 // pred_check
        %p356 = pneg %p121
      $region34: #{embeddings_forward.1} parent=31 // pred_check_branch
        %358 = sbr.rel (%p356) target = $region36
      $region35: #{embeddings_forward.1} parent=31 // pred_region
        %s359 = smul.u32 4, %s18
      $region36: #{embeddings_forward.1} parent=31 // pred_fallthru
        _
    $region32: #{embeddings_forward.1} parent=5 // pred_fallthru
      _
    %p360 = scmp.le.s32.totalorder 2, %s9
    // Predicated region
    $region37: #{embeddings_forward.1} parent=5 // pred_check
      %p361 = pneg %p360
    $region38: #{embeddings_forward.1} parent=5 // pred_check_branch
      %363 = sbr.rel (%p361) target = $region40
    $region39: #{embeddings_forward.1} parent=5 // pred_region
      %s364 = ssub.s32 %s9, 2
      // Predicated region
      $region41: #{embeddings_forward.1} parent=39 // pred_check
        %p365 = pneg %p127
      $region42: #{embeddings_forward.1} parent=39 // pred_check_branch
        %367 = sbr.rel (%p365) target = $region44
      $region43: #{embeddings_forward.1} parent=39 // pred_region
        %s368 = smul.u32 4, %s20
        %p369 = scmp.lt.s32.totalorder %s21, 1
        %s370 = scalar_select %p369, %s21, 1
        %p371 = scmp.lt.s32.totalorder %s368, 3
        %s372 = scalar_select %p371, %s368, 3
        %s373 = smul.addr %s370, 4
        %s374 = sadd.s32 %s372, %s373
        %s375 = smul.addr %s374, 4
        %s376 = scalar_lea.vmem %s3, %s375
      $region44: #{embeddings_forward.1} parent=39 // pred_fallthru
        _
    $region40: #{embeddings_forward.1} parent=5 // pred_fallthru
      _
  $region6: #{embeddings_forward.1} parent=0 // loop_footer
    %s13 = sadd.s32 1, %s9
  $region7: #{embeddings_forward.1} parent=0 // loop_footer_branch
    %8 = sbr.rel target = $region3
  $region8: #{embeddings_forward.1} parent=0 // loop_exit
    _

</llo_original>
